<compile_context>
chip_gen: v5e
topology: v5e:2x2
jax: 0.10.0
libtpu: 0.0.40
codegen_flags: <defaults>
</compile_context>

<pallas_src>
import jax
import jax.numpy as jnp
from jax.experimental import pallas as pl
from jax.experimental.pallas import tpu as pltpu


# --------------------------------------------------------------------------- #
# Helpers
# --------------------------------------------------------------------------- #
def _round_up(v, m):
    return (v + m - 1) // m * m


def _batch_tile(B, cap=512):
    """Balanced batch tile, multiple of 8, <= cap, >=2 tiles when B allows."""
    if B <= 8:
        return B
    n_tiles = max(2, pl.cdiv(B, cap))          # >=2 steps -> v7x megacore sharding
    tb = _round_up(pl.cdiv(B, n_tiles), 8)     # balanced (no tiny tail tile)
    return min(tb, cap)


def _vmem_limit_bytes(tb, I, H, w_bytes):
    weights = (I * H + H * H) * w_bytes        # Buffered(1): single resident copy
    biases = 2 * H * 4
    acts = 2 * tb * (I + H) * 4                # double-buffered x / h tiles (f32)
    outs = 2 * tb * H * 4                      # double-buffered output tiles
    est = weights + biases + acts + outs
    est = est * 5 // 4 + (2 << 20)             # 25% + 2 MiB compiler headroom
    return int(min(64 << 20, max(16 << 20, est)))


def _resident_spec(block_shape, index_map):
    """BlockSpec for a block that stays resident in VMEM (constant index_map).

    Buffered(1) -> one VMEM copy instead of a double buffer; falls back to a
    plain BlockSpec if this Pallas version does not expose pipeline_mode.
    """
    try:
        return pl.BlockSpec(block_shape, index_map, pipeline_mode=pl.Buffered(1))
    except (AttributeError, TypeError):
        return pl.BlockSpec(block_shape, index_map)


# --------------------------------------------------------------------------- #
# Single-cell kernel:  out = tanh(x @ W_xh + b_xh + h @ W_hh + b_hh)
# --------------------------------------------------------------------------- #
def _rnn_tanh_cell_kernel(x_ref, h_ref, wxh_ref, whh_ref, bxh_ref, bhh_ref, o_ref):
    # Two MXU dots into one f32 accumulator. Activations cast to the weight
    # dtype on the VPU (no-op for f32 weights); bias add + tanh stay f32.
    wd = wxh_ref.dtype
    acc = jnp.dot(x_ref[...].astype(wd), wxh_ref[...],
                  preferred_element_type=jnp.float32)
    acc = acc + jnp.dot(h_ref[...].astype(wd), whh_ref[...],
                        preferred_element_type=jnp.float32)
    acc = acc + bxh_ref[...] + bhh_ref[...]
    o_ref[...] = jnp.tanh(acc).astype(o_ref.dtype)


@jax.jit
def rnn_tanh_cell(x, h, w_xh, w_hh, b_xh, b_hh):
    """Pallas implementation of NaiveRNNTanhCell.forward (one timestep).

    To use bf16 MXU operands, pass w_xh / w_hh already cast to bf16 (do the
    cast once outside any timestep loop); activations stay f32 in HBM and are
    cast inside the kernel.
    """
    B, I = x.shape
    H = w_xh.shape[1]
    b_xh2 = b_xh.reshape(1, H).astype(jnp.float32)   # tiny (H elems), kept f32
    b_hh2 = b_hh.reshape(1, H).astype(jnp.float32)

    tb = _batch_tile(B)
    grid = (pl.cdiv(B, tb),)
    w_bytes = jnp.dtype(w_xh.dtype).itemsize

    cost = pl.CostEstimate(
        flops=2 * B * (I + H) * H,
        transcendentals=B * H,
        bytes_accessed=4 * B * (I + 2 * H) + w_bytes * (I * H + H * H) + 8 * H,
    )

    # Note: when B % tb != 0 the padded rows of the last tile feed tanh of
    # arbitrary data; rows are independent and the write is clipped -> harmless.
    return pl.pallas_call(
        _rnn_tanh_cell_kernel,
        out_shape=jax.ShapeDtypeStruct((B, H), x.dtype),
        grid=grid,
        in_specs=[
            pl.BlockSpec((tb, I), lambda i: (i, 0)),        # x batch tile
            pl.BlockSpec((tb, H), lambda i: (i, 0)),        # h batch tile
            _resident_spec((I, H), lambda i: (0, 0)),       # W_xh (resident)
            _resident_spec((H, H), lambda i: (0, 0)),       # W_hh (resident)
            _resident_spec((1, H), lambda i: (0, 0)),       # b_xh (resident)
            _resident_spec((1, H), lambda i: (0, 0)),       # b_hh (resident)
        ],
        out_specs=pl.BlockSpec((tb, H), lambda i: (i, 0)),
        compiler_params=pltpu.CompilerParams(
            dimension_semantics=("parallel",),               # batch tiles independent
            vmem_limit_bytes=_vmem_limit_bytes(tb, I, H, w_bytes),
        ),
        cost_estimate=cost,
    )(x, h, w_xh, w_hh, b_xh2, b_hh2)


# --------------------------------------------------------------------------- #
# Fused T-step recurrence in a single pallas_call (weights resident, hidden
# state carried in VMEM scratch across grid iterations).
# --------------------------------------------------------------------------- #
def _rnn_tanh_seq_kernel(x_ref, h0_ref, wxh_ref, whh_ref, bxh_ref, bhh_ref,
                         out_ref, h_scr):
    t = pl.program_id(0)

    @pl.when(t == 0)
    def _():
        h_scr[...] = h0_ref[...].astype(jnp.float32)

    wd = wxh_ref.dtype
    acc = jnp.dot(x_ref[0].astype(wd), wxh_ref[...],
                  preferred_element_type=jnp.float32)
    acc = acc + jnp.dot(h_scr[...].astype(wd), whh_ref[...],
                        preferred_element_type=jnp.float32)
    acc = acc + bxh_ref[...] + bhh_ref[...]
    h_new = jnp.tanh(acc)
    h_scr[...] = h_new                                   # f32 carry (no bf16 drift)
    out_ref[0] = h_new.astype(out_ref.dtype)


@jax.jit
def rnn_tanh_sequence(x_seq, h0, w_xh, w_hh, b_xh, b_hh):
    """Apply the cell over T timesteps in ONE pallas_call.

    x_seq: (T, B, I), h0: (B, H) -> returns all hidden states (T, B, H).
    Weight DMA and per-call overhead are paid once per sequence.
    """
    T, B, I = x_seq.shape
    H = w_xh.shape[1]
    b_xh2 = b_xh.reshape(1, H).astype(jnp.float32)
    b_hh2 = b_hh.reshape(1, H).astype(jnp.float32)
    w_bytes = jnp.dtype(w_xh.dtype).itemsize

    cost = pl.CostEstimate(
        flops=2 * T * B * (I + H) * H,
        transcendentals=T * B * H,
        bytes_accessed=(4 * T * B * (I + H) + 4 * B * H
                        + w_bytes * (I * H + H * H) + 8 * H),
    )

    # TODO(synk): for very large B, add a batch tile axis in front of the T axis.
    return pl.pallas_call(
        _rnn_tanh_seq_kernel,
        out_shape=jax.ShapeDtypeStruct((T, B, H), x_seq.dtype),
        grid=(T,),
        in_specs=[
            pl.BlockSpec((1, B, I), lambda t: (t, 0, 0)),    # x_t, pipelined over T
            _resident_spec((B, H), lambda t: (0, 0)),        # h0 (read at t == 0)
            _resident_spec((I, H), lambda t: (0, 0)),        # W_xh (resident)
            _resident_spec((H, H), lambda t: (0, 0)),        # W_hh (resident)
            _resident_spec((1, H), lambda t: (0, 0)),        # b_xh
            _resident_spec((1, H), lambda t: (0, 0)),        # b_hh
        ],
        out_specs=pl.BlockSpec((1, B, H), lambda t: (t, 0, 0)),
        scratch_shapes=[pltpu.VMEM((B, H), jnp.float32)],    # carried hidden state
        compiler_params=pltpu.CompilerParams(
            dimension_semantics=("arbitrary",),              # sequential recurrence
            vmem_limit_bytes=_vmem_limit_bytes(B, I, H, w_bytes),
        ),
        cost_estimate=cost,
    )(x_seq, h0, w_xh, w_hh, b_xh2, b_hh2)


# --------------------------------------------------------------------------- #
# References
# --------------------------------------------------------------------------- #
def reference_cell(x, h, w_xh, w_hh, b_xh, b_hh):
    return jnp.tanh(x @ w_xh + b_xh + h @ w_hh + b_hh)


def reference_sequence(x_seq, h0, w_xh, w_hh, b_xh, b_hh):
    def step(h, x):
        h_new = jnp.tanh(x @ w_xh + b_xh + h @ w_hh + b_hh)
        return h_new, h_new
    _, ys = jax.lax.scan(step, h0, x_seq)
    return ys


# --------------------------------------------------------------------------- #
# Self-test
# --------------------------------------------------------------------------- #
if __name__ == "__main__":
    batch, input_size, hidden_size, seq_len = 8, 64, 128, 8

    key = jax.random.PRNGKey(0)
    k_x, k_h, k_wxh, k_whh, k_bxh, k_bhh, k_seq = jax.random.split(key, 7)

    # Parameter init mimicking reset_parameters(): uniform(-stdv, stdv),
    # stdv = 1/sqrt(hidden_size).
    stdv = 1.0 / jnp.sqrt(jnp.float32(hidden_size))
    w_xh = jax.random.uniform(k_wxh, (input_size, hidden_size), jnp.float32, -stdv, stdv)
    w_hh = jax.random.uniform(k_whh, (hidden_size, hidden_size), jnp.float32, -stdv, stdv)
    b_xh = jax.random.uniform(k_bxh, (hidden_size,), jnp.float32, -stdv, stdv)
    b_hh = jax.random.uniform(k_bhh, (hidden_size,), jnp.float32, -stdv, stdv)

    x = jax.random.normal(k_x, (batch, input_size), jnp.float32)
    h = jax.random.normal(k_h, (batch, hidden_size), jnp.float32)

    ref = reference_cell(x, h, w_xh, w_hh, b_xh, b_hh)

    # f32 cell.
    out = jax.block_until_ready(rnn_tanh_cell(x, h, w_xh, w_hh, b_xh, b_hh))
    assert out.shape == (batch, hidden_size)
    assert jnp.allclose(out, ref, atol=1e-5, rtol=1e-5)

    # hidden=None path of the module -> zeros initial hidden state.
    h0 = jnp.zeros((batch, hidden_size), jnp.float32)
    out0 = jax.block_until_ready(rnn_tanh_cell(x, h0, w_xh, w_hh, b_xh, b_hh))
    assert jnp.allclose(out0, reference_cell(x, h0, w_xh, w_hh, b_xh, b_hh),
                        atol=1e-5, rtol=1e-5)

    # bf16-weight path: weights cast ONCE outside the call; activations stay f32
    # in HBM and are cast inside the kernel.
    w_xh_bf, w_hh_bf = w_xh.astype(jnp.bfloat16), w_hh.astype(jnp.bfloat16)
    out_bf = jax.block_until_ready(rnn_tanh_cell(x, h, w_xh_bf, w_hh_bf, b_xh, b_hh))
    assert jnp.allclose(out_bf, ref, atol=2e-2, rtol=2e-2)

    # Fused T-step recurrence in a single pallas_call.
    x_seq = jax.random.normal(k_seq, (seq_len, batch, input_size), jnp.float32)
    seq_out = jax.block_until_ready(rnn_tanh_sequence(x_seq, h, w_xh, w_hh, b_xh, b_hh))
    seq_ref = reference_sequence(x_seq, h, w_xh, w_hh, b_xh, b_hh)
    assert seq_out.shape == (seq_len, batch, hidden_size)
    assert jnp.allclose(seq_out, seq_ref, atol=1e-4, rtol=1e-4)

    print("KERNEL_OK")
</pallas_src>

<mosaic_0001>
module attributes {stable_mosaic.version = 11 : i64} {
  func.func @_rnn_tanh_cell_kernel(%arg0: i32, %arg1: memref<8x64xf32, #tpu.memory_space<vmem>>, %arg2: memref<8x128xf32, #tpu.memory_space<vmem>>, %arg3: memref<64x128xf32, #tpu.memory_space<vmem>>, %arg4: memref<128x128xf32, #tpu.memory_space<vmem>>, %arg5: memref<1x128xf32, #tpu.memory_space<vmem>>, %arg6: memref<1x128xf32, #tpu.memory_space<vmem>>, %arg7: memref<8x128xf32, #tpu.memory_space<vmem>>) attributes {dimension_semantics = [#tpu.dimension_semantics<parallel>], iteration_bounds = array<i64: 1>, scalar_prefetch = 0 : i64, scratch_operands = 0 : i64, tpu.core_type = #tpu.core_type<tc>, window_params = [{transform_indices = @transform_0, window_bounds = array<i64: 8, 64>}, {transform_indices = @transform_1, window_bounds = array<i64: 8, 128>}, {pipeline_mode = #tpu.pipeline_mode<synchronous>, transform_indices = @transform_2, window_bounds = array<i64: 64, 128>}, {pipeline_mode = #tpu.pipeline_mode<synchronous>, transform_indices = @transform_3, window_bounds = array<i64: 128, 128>}, {pipeline_mode = #tpu.pipeline_mode<synchronous>, transform_indices = @transform_4, window_bounds = array<i64: 1, 128>}, {pipeline_mode = #tpu.pipeline_mode<synchronous>, transform_indices = @transform_5, window_bounds = array<i64: 1, 128>}, {transform_indices = @transform_6, window_bounds = array<i64: 8, 128>}]} {
    %c0 = arith.constant 0 : index
    %c0_0 = arith.constant 0 : index
    %0 = vector.load %arg1[%c0, %c0_0] : memref<8x64xf32, #tpu.memory_space<vmem>>, vector<8x64xf32>
    %c0_1 = arith.constant 0 : index
    %c0_2 = arith.constant 0 : index
    %1 = vector.load %arg3[%c0_1, %c0_2] : memref<64x128xf32, #tpu.memory_space<vmem>>, vector<64x128xf32>
    %cst = arith.constant dense<0.000000e+00> : vector<8x128xf32>
    %2 = tpu.matmul %0, %1, %cst {dimension_numbers = #tpu.dot_dimension_numbers<[1], [0], [0], [1], [0, 0, 1, 1], [], []>} : vector<8x64xf32>, vector<64x128xf32>, vector<8x128xf32> -> vector<8x128xf32>
    %c0_3 = arith.constant 0 : index
    %c0_4 = arith.constant 0 : index
    %3 = vector.load %arg2[%c0_3, %c0_4] : memref<8x128xf32, #tpu.memory_space<vmem>>, vector<8x128xf32>
    %c0_5 = arith.constant 0 : index
    %c0_6 = arith.constant 0 : index
    %4 = vector.load %arg4[%c0_5, %c0_6] : memref<128x128xf32, #tpu.memory_space<vmem>>, vector<128x128xf32>
    %cst_7 = arith.constant dense<0.000000e+00> : vector<8x128xf32>
    %5 = tpu.matmul %3, %4, %cst_7 {dimension_numbers = #tpu.dot_dimension_numbers<[1], [0], [0], [1], [0, 0, 1, 1], [], []>} : vector<8x128xf32>, vector<128x128xf32>, vector<8x128xf32> -> vector<8x128xf32>
    %6 = arith.addf %2, %5 : vector<8x128xf32>
    %c0_8 = arith.constant 0 : index
    %c0_9 = arith.constant 0 : index
    %7 = vector.load %arg5[%c0_8, %c0_9] : memref<1x128xf32, #tpu.memory_space<vmem>>, vector<1x128xf32>
    %8 = vector.broadcast %7 : vector<1x128xf32> to vector<8x128xf32>
    %9 = arith.addf %6, %8 : vector<8x128xf32>
    %c0_10 = arith.constant 0 : index
    %c0_11 = arith.constant 0 : index
    %10 = vector.load %arg6[%c0_10, %c0_11] : memref<1x128xf32, #tpu.memory_space<vmem>>, vector<1x128xf32>
    %11 = vector.broadcast %10 : vector<1x128xf32> to vector<8x128xf32>
    %12 = arith.addf %9, %11 : vector<8x128xf32>
    %13 = math.tanh %12 : vector<8x128xf32>
    %c0_12 = arith.constant 0 : index
    %c0_13 = arith.constant 0 : index
    %14 = vector.load %arg7[%c0_12, %c0_13] : memref<8x128xf32, #tpu.memory_space<vmem>>, vector<8x128xf32>
    tpu.vector_store %arg7[%c0_12, %c0_13], %13 {strides = array<i32>} : memref<8x128xf32, #tpu.memory_space<vmem>>, vector<8x128xf32>,
    return
  }
  func.func @transform_0(%arg0: i32) -> (i32, i32) {
    %c0_i32 = arith.constant 0 : i32
    %c0_i32_0 = arith.constant 0 : i32
    return %arg0, %c0_i32 : i32, i32
  }
  func.func @transform_1(%arg0: i32) -> (i32, i32) {
    %c0_i32 = arith.constant 0 : i32
    %c0_i32_0 = arith.constant 0 : i32
    return %arg0, %c0_i32 : i32, i32
  }
  func.func @transform_2(%arg0: i32) -> (i32, i32) {
    %c0_i32 = arith.constant 0 : i32
    %c0_i32_0 = arith.constant 0 : i32
    %c0_i32_1 = arith.constant 0 : i32
    return %c0_i32, %c0_i32_0 : i32, i32
  }
  func.func @transform_3(%arg0: i32) -> (i32, i32) {
    %c0_i32 = arith.constant 0 : i32
    %c0_i32_0 = arith.constant 0 : i32
    %c0_i32_1 = arith.constant 0 : i32
    return %c0_i32, %c0_i32_0 : i32, i32
  }
  func.func @transform_4(%arg0: i32) -> (i32, i32) {
    %c0_i32 = arith.constant 0 : i32
    %c0_i32_0 = arith.constant 0 : i32
    %c0_i32_1 = arith.constant 0 : i32
    return %c0_i32, %c0_i32_0 : i32, i32
  }
  func.func @transform_5(%arg0: i32) -> (i32, i32) {
    %c0_i32 = arith.constant 0 : i32
    %c0_i32_0 = arith.constant 0 : i32
    %c0_i32_1 = arith.constant 0 : i32
    return %c0_i32, %c0_i32_0 : i32, i32
  }
  func.func @transform_6(%arg0: i32) -> (i32, i32) {
    %c0_i32 = arith.constant 0 : i32
    %c0_i32_0 = arith.constant 0 : i32
    return %arg0, %c0_i32 : i32, i32
  }
}

</mosaic_0001>

<llo_original>
// kernel: rnn_tanh_cell.1
$region0: #{rnn_tanh_cell.1}
  #allocation0 [shape = 'u32[]', space=smem, size = 0x4, offset = 0x4, fixed_abs, tag = 'smem constant byte address 0x4 - core index']
  #allocation1 [shape = 'u32[72,128]{1,0:T(1,128)}', space=vmem, size = 0x9000, scoped, tag = 'internal scratch']
  %s0 = inlined_call_operand.hbm [shape: f32[8,64], index: 0, kind: input, shape index: {}]
  %s1 = inlined_call_operand.hbm [shape: f32[8,128], index: 1, kind: input, shape index: {}]
  %s2 = inlined_call_operand.hbm [shape: f32[64,128], index: 2, kind: input, shape index: {}]
  %s3 = inlined_call_operand.hbm [shape: f32[128,128], index: 3, kind: input, shape index: {}]
  %s4 = inlined_call_operand.vmem [shape: f32[1,128], index: 4, kind: input, shape index: {}]
  %s5 = inlined_call_operand.vmem [shape: f32[1,128], index: 5, kind: input, shape index: {}]
  %s6 = inlined_call_operand.hbm [shape: f32[8,128], index: 6, kind: output, shape index: {}]
  %s7 = sld [smem:[#allocation0]]
  $region50: #{rnn_tanh_cell.1} parent=0
    _
  %s9 = ssub.s32 1, %s7
  %s10 = scalar_select 0, %s9, %s7
  $region1: #{rnn_tanh_cell.1} parent=0
    #allocation2 [shape = 'u8[4096]{0}', space=vmem, size = 0x1000, scoped, tag = 'input window, operand 0, single buffered']
    #allocation3 [shape = 's32[1]{0}', space=sflag, size = 0x4, scoped, tag = 'scoped memory for rnn_tanh_cell.1']
    #allocation4 [shape = 's32[1]{0}', space=sflag, size = 0x4, scoped, tag = 'scoped memory for rnn_tanh_cell.1']
    #allocation5 [shape = 'u8[4096]{0}', space=vmem, size = 0x1000, scoped, tag = 'input window, operand 1, single buffered']
    #allocation6 [shape = 's32[1]{0}', space=sflag, size = 0x4, scoped, tag = 'scoped memory for rnn_tanh_cell.1']
    #allocation7 [shape = 'u8[32768]{0}', space=vmem, size = 0x8000, scoped, tag = 'input window, operand 2, single buffered']
    #allocation8 [shape = 'u8[65536]{0}', space=vmem, size = 0x10000, scoped, tag = 'input window, operand 3, single buffered']
    #allocation9 [shape = 's32[1]{0}', space=sflag, size = 0x4, scoped, tag = 'scoped memory for rnn_tanh_cell.1']
    #allocation10 [shape = 'u8[4096]{0}', space=vmem, size = 0x1000, scoped, tag = 'output window, operand 0, single buffered']
    %11 = vsyncpa [#allocation3], 0
    %12 = vsyncpa [#allocation6], 0
    %13 = vsyncpa [#allocation9], 0
    %14 = vsyncpa [#allocation4], 0
    // Predicated region
    $region2: #{rnn_tanh_cell.1} parent=1 // pred_check
      _
    $region3: #{rnn_tanh_cell.1} parent=1 // pred_check_branch
      %16 = sbr.rel (0) target = $region5
    $region4: #{rnn_tanh_cell.1} parent=1 // pred_region
      %18 = vsyncadd [#allocation3], 0
      %s20 = sshll.u32 %s0, 4
      %s21 = int_to_ptr.hbm [resolvable:$true] %s20
      %s22 = sshll.u32 [#allocation2], 4
      %s23 = int_to_ptr.vmem [resolvable:$true] %s22
      %25 = dma.hbm_to_vmem [thread:$0]  %s21, 128, %s23, [#allocation3]
    $region5: #{rnn_tanh_cell.1} parent=1 // pred_fallthru
      _
    // Predicated region
    $region6: #{rnn_tanh_cell.1} parent=1 // pred_check
      _
    $region7: #{rnn_tanh_cell.1} parent=1 // pred_check_branch
      %27 = sbr.rel (0) target = $region9
    $region8: #{rnn_tanh_cell.1} parent=1 // pred_region
      %29 = vsyncadd [#allocation6], 0
      %s31 = sshll.u32 %s1, 4
      %s32 = int_to_ptr.hbm [resolvable:$true] %s31
      %s33 = sshll.u32 [#allocation5], 4
      %s34 = int_to_ptr.vmem [resolvable:$true] %s33
      %36 = dma.hbm_to_vmem [thread:$0]  %s32, 128, %s34, [#allocation6]
    $region9: #{rnn_tanh_cell.1} parent=1 // pred_fallthru
      _
    // Predicated region
    $region10: #{rnn_tanh_cell.1} parent=1 // pred_check
      _
    $region11: #{rnn_tanh_cell.1} parent=1 // pred_check_branch
      %38 = sbr.rel (0) target = $region13
    $region12: #{rnn_tanh_cell.1} parent=1 // pred_region
      %40 = vsyncadd [#allocation6], 0
      %s41 = sshll.u32 %s2, 4
      %s42 = int_to_ptr.hbm [resolvable:$true] %s41
      %s43 = sshll.u32 [#allocation7], 4
      %s44 = int_to_ptr.vmem [resolvable:$true] %s43
      %49 = dma.hbm_to_vmem [thread:$0]  %s42, 1024, %s44, [#allocation6], 128, 128, 8
    $region13: #{rnn_tanh_cell.1} parent=1 // pred_fallthru
      _
    // Predicated region
    $region14: #{rnn_tanh_cell.1} parent=1 // pred_check
      _
    $region15: #{rnn_tanh_cell.1} parent=1 // pred_check_branch
      %51 = sbr.rel (0) target = $region17
    $region16: #{rnn_tanh_cell.1} parent=1 // pred_region
      %53 = vsyncadd [#allocation9], 0
      %s54 = sshll.u32 %s3, 4
      %s55 = int_to_ptr.hbm [resolvable:$true] %s54
      %s56 = sshll.u32 [#allocation8], 4
      %s57 = int_to_ptr.vmem [resolvable:$true] %s56
      %62 = dma.hbm_to_vmem [thread:$0]  %s55, 2048, %s57, [#allocation9], 128, 128, 8
    $region17: #{rnn_tanh_cell.1} parent=1 // pred_fallthru
      _
    // Predicated region
    $region18: #{rnn_tanh_cell.1} parent=1 // pred_check
      _
    $region19: #{rnn_tanh_cell.1} parent=1 // pred_check_branch
      %64 = sbr.rel (0) target = $region21
    $region20: #{rnn_tanh_cell.1} parent=1 // pred_region
      _
    $region21: #{rnn_tanh_cell.1} parent=1 // pred_fallthru
      _
    // Predicated region
    $region22: #{rnn_tanh_cell.1} parent=1 // pred_check
      _
    $region23: #{rnn_tanh_cell.1} parent=1 // pred_check_branch
      %66 = sbr.rel (0) target = $region25
    $region24: #{rnn_tanh_cell.1} parent=1 // pred_region
      _
    $region25: #{rnn_tanh_cell.1} parent=1 // pred_fallthru
      _
    // Predicated region
    $region26: #{rnn_tanh_cell.1} parent=1 // pred_check
      _
    $region27: #{rnn_tanh_cell.1} parent=1 // pred_check_branch
      %68 = sbr.rel (0) target = $region29
    $region28: #{rnn_tanh_cell.1} parent=1 // pred_region
      %70 = dma.done [#allocation3], 128
    $region29: #{rnn_tanh_cell.1} parent=1 // pred_fallthru
      _
    // Predicated region
    $region30: #{rnn_tanh_cell.1} parent=1 // pred_check
      _
    $region31: #{rnn_tanh_cell.1} parent=1 // pred_check_branch
      %72 = sbr.rel (0) target = $region33
    $region32: #{rnn_tanh_cell.1} parent=1 // pred_region
      %74 = dma.done [#allocation6], 128
    $region33: #{rnn_tanh_cell.1} parent=1 // pred_fallthru
      _
    // Predicated region
    $region34: #{rnn_tanh_cell.1} parent=1 // pred_check
      _
    $region35: #{rnn_tanh_cell.1} parent=1 // pred_check_branch
      %76 = sbr.rel (0) target = $region37
    $region36: #{rnn_tanh_cell.1} parent=1 // pred_region
      %78 = dma.done [#allocation6], 1024
    $region37: #{rnn_tanh_cell.1} parent=1 // pred_fallthru
      _
    // Predicated region
    $region38: #{rnn_tanh_cell.1} parent=1 // pred_check
      _
    $region39: #{rnn_tanh_cell.1} parent=1 // pred_check_branch
      %80 = sbr.rel (0) target = $region41
    $region40: #{rnn_tanh_cell.1} parent=1 // pred_region
      %82 = dma.done [#allocation9], 2048
    $region41: #{rnn_tanh_cell.1} parent=1 // pred_fallthru
      _
    %v83 = vld [vmem:[#allocation2] sm:$0xff]
    %v84 = vld [vmem:[#allocation7] sm:$0xff]
    %v85 = vld [vmem:[#allocation7 + $0x8] sm:$0xff]
    %v86 = vld [vmem:[#allocation7 + $0x10] sm:$0xff]
    %v87 = vld [vmem:[#allocation7 + $0x18] sm:$0xff]
    %v88 = vld [vmem:[#allocation7 + $0x20] sm:$0xff]
    %v89 = vld [vmem:[#allocation7 + $0x28] sm:$0xff]
    %v90 = vld [vmem:[#allocation7 + $0x30] sm:$0xff]
    %v91 = vld [vmem:[#allocation7 + $0x38] sm:$0xff]
    %v92 = vld [vmem:[#allocation5] sm:$0xff]
    %v93 = vld [vmem:[#allocation8] sm:$0xff]
    %v94 = vld [vmem:[#allocation8 + $0x8] sm:$0xff]
    %v95 = vld [vmem:[#allocation8 + $0x10] sm:$0xff]
    %v96 = vld [vmem:[#allocation8 + $0x18] sm:$0xff]
    %v97 = vld [vmem:[#allocation8 + $0x20] sm:$0xff]
    %v98 = vld [vmem:[#allocation8 + $0x28] sm:$0xff]
    %v99 = vld [vmem:[#allocation8 + $0x30] sm:$0xff]
    %v100 = vld [vmem:[#allocation8 + $0x38] sm:$0xff]
    %v101 = vld [vmem:[#allocation8 + $0x40] sm:$0xff]
    %v102 = vld [vmem:[#allocation8 + $0x48] sm:$0xff]
    %v103 = vld [vmem:[#allocation8 + $0x50] sm:$0xff]
    %v104 = vld [vmem:[#allocation8 + $0x58] sm:$0xff]
    %v105 = vld [vmem:[#allocation8 + $0x60] sm:$0xff]
    %v106 = vld [vmem:[#allocation8 + $0x68] sm:$0xff]
    %v107 = vld [vmem:[#allocation8 + $0x70] sm:$0xff]
    %v108 = vld [vmem:[#allocation8 + $0x78] sm:$0xff]
    %109 = vmatpush.msra.mxu0 %v108
    %110 = vmatpush.msra.mxu0 %v107
    %111 = vmatpush.msra.mxu0 %v106
    %112 = vmatpush.msra.mxu0 %v105
    %113 = vmatpush.msra.mxu0 %v104
    %114 = vmatpush.msra.mxu0 %v103
    %115 = vmatpush.msra.mxu0 %v102
    %116 = vmatpush.msra.mxu0 %v101
    %117 = vmatpush.msra.mxu0 %v100
    %118 = vmatpush.msra.mxu0 %v99
    %119 = vmatpush.msra.mxu0 %v98
    %120 = vmatpush.msra.mxu0 %v97
    %121 = vmatpush.msra.mxu0 %v96
    %122 = vmatpush.msra.mxu0 %v95
    %123 = vmatpush.msra.mxu0 %v94
    %124 = vmatpush.msra.mxu0 %v93
    %125 = vmatmul.f32.gmra.mxu0 %v92
    %v126 = vpop.f32.mrf.mxu0
    %v127 = vadd.f32 0.0, %v126
    %128 = vdwg.mxu0
    %vm129 = vcmask 523264
    %v131 = vsel %vm129, %v83, 0
    %133 = vmatpush.msra.mxu0 0.0
    %134 = vmatpush.msra.mxu0 0.0
    %135 = vmatpush.msra.mxu0 0.0
    %136 = vmatpush.msra.mxu0 0.0
    %137 = vmatpush.msra.mxu0 0.0
    %138 = vmatpush.msra.mxu0 0.0
    %139 = vmatpush.msra.mxu0 0.0
    %140 = vmatpush.msra.mxu0 0.0
    %141 = vmatpush.msra.mxu0 %v91
    %142 = vmatpush.msra.mxu0 %v90
    %143 = vmatpush.msra.mxu0 %v89
    %144 = vmatpush.msra.mxu0 %v88
    %145 = vmatpush.msra.mxu0 %v87
    %146 = vmatpush.msra.mxu0 %v86
    %147 = vmatpush.msra.mxu0 %v85
    %148 = vmatpush.msra.mxu0 %v84
    %149 = vmatmul.f32.gmra.mxu0 %v131
    %v150 = vpop.f32.mrf.mxu0
    %v151 = vadd.f32 %v127, %v150
    %152 = vdwg.mxu0
    %v153 = vld [vmem:[%s4] sm:$0x1]
    %v155 = vperm.slane %v153, 0
    %v157 = vadd.f32 %v151, %v155
    %v158 = vld [vmem:[%s5] sm:$0x1]
    %v160 = vperm.slane %v158, 0
    %v162 = vadd.f32 %v157, %v160
    %v163 = vtanh.pop %v162
    %164 = vst [vmem:[#allocation10] sm:$0xff] %v163
    // Predicated region
    $region42: #{rnn_tanh_cell.1} parent=1 // pred_check
      _
    $region43: #{rnn_tanh_cell.1} parent=1 // pred_check_branch
      %166 = sbr.rel (0) target = $region45
    $region44: #{rnn_tanh_cell.1} parent=1 // pred_region
      %168 = vsyncadd [#allocation4], 0
      %s170 = sshll.u32 [#allocation10], 4
      %s171 = int_to_ptr.vmem [resolvable:$true] %s170
      %s172 = sshll.u32 %s6, 4
      %s173 = int_to_ptr.hbm [resolvable:$true] %s172
      %175 = dma.vmem_to_hbm [thread:$0]  %s171, 128, %s173, [#allocation4]
    $region45: #{rnn_tanh_cell.1} parent=1 // pred_fallthru
      _
    // Predicated region
    $region46: #{rnn_tanh_cell.1} parent=1 // pred_check
      _
    $region47: #{rnn_tanh_cell.1} parent=1 // pred_check_branch
      %177 = sbr.rel (0) target = $region49
    $region48: #{rnn_tanh_cell.1} parent=1 // pred_region
      %179 = dma.done [#allocation4], 128
    $region49: #{rnn_tanh_cell.1} parent=1 // pred_fallthru
      _
    %180 = vsyncpa [#allocation3], 1
    %181 = vsyncpa [#allocation6], 1
    %182 = vsyncpa [#allocation9], 1
    %183 = vsyncpa [#allocation4], 1

</llo_original>
